<compile_context>
chip_gen: v5e
topology: v5e:2x2
jax: 0.10.0
libtpu: 0.0.40
codegen_flags: <defaults>
</compile_context>

<pallas_src>
import jax
import jax.numpy as jnp
from jax.experimental import pallas as pl
from jax.experimental.pallas import tpu as pltpu

_LANES = 128          # vreg lane width
_SUBLANES = 8         # f32 sublane count
_MIN_ELEMS = _SUBLANES * _LANES   # below this (or non-divisible), skip Pallas


def _mul_kernel(x_ref, w_ref, o_ref):
    # x_ref: (tile_rows, 128) block in VMEM; w_ref: (1, 128) lane-aligned weight
    # slab. Pure VPU multiply with a cheap sublane broadcast of the weight row.
    o_ref[...] = x_ref[...] * w_ref[...]


def toy_model_forward(x: jax.Array, weight: jax.Array) -> jax.Array:
    """Equivalent of PyTorch `x * weight` with weight (2, 2) broadcasting."""
    out_dtype = jnp.result_type(x.dtype, weight.dtype)
    total = x.size
    wsize = weight.size  # 4 for the (2, 2) weight

    # Fallback: tiny inputs, or sizes that don't reshape cleanly into
    # (multiple-of-8 rows, 128 lanes) with the weight pattern aligned to lanes.
    if (
        total < _MIN_ELEMS
        or total % (_SUBLANES * _LANES) != 0
        or _LANES % wsize != 0
        or x.shape[-2:] != weight.shape
    ):
        return (x * weight).astype(out_dtype)

    rows = total // _LANES  # multiple of 8 by construction

    # Lane-dense slab: trailing dims (2, 2) flatten row-major, so every
    # 128-lane row contains the (i, j) weight pattern repeated 128 // 4 times.
    x2d = x.reshape(rows, _LANES).astype(out_dtype)
    w_slab = jnp.tile(weight.reshape(-1), _LANES // wsize).reshape(1, _LANES)
    w_slab = w_slab.astype(out_dtype)

    # ~1 MiB f32 blocks; double-buffered in+out stays < 8 MiB of VMEM, which is
    # safe on every generation (v7x included). Pick a tile that divides rows so
    # every block is full-width (no ragged last block).
    tile_rows = min(rows, 2048)
    while rows % tile_rows != 0:
        tile_rows -= _SUBLANES  # rows and tile_rows are multiples of 8

    grid = (rows // tile_rows,)

    out2d = pl.pallas_call(
        _mul_kernel,
        out_shape=jax.ShapeDtypeStruct((rows, _LANES), out_dtype),
        grid=grid,
        in_specs=[
            pl.BlockSpec((tile_rows, _LANES), lambda i: (i, 0)),
            pl.BlockSpec((1, _LANES), lambda i: (0, 0)),
        ],
        out_specs=pl.BlockSpec((tile_rows, _LANES), lambda i: (i, 0)),
        compiler_params=pltpu.CompilerParams(
            dimension_semantics=("parallel",),
        ),
    )(x2d, w_slab)

    return out2d.reshape(x.shape)


if __name__ == "__main__":
    key = jax.random.PRNGKey(0)
    kx, kw, kx2 = jax.random.split(key, 3)

    # Deterministic parameter init (torch.Tensor(2,2) is uninitialized memory;
    # we use a deterministic random init instead).
    weight = jax.random.normal(kw, (2, 2), dtype=jnp.float32)

    # Pallas path: batch of 1024 (2,2) matrices -> (32, 128) lane-dense slab.
    x = jax.random.normal(kx, (1024, 2, 2), dtype=jnp.float32)
    out = toy_model_forward(x, weight)
    jax.block_until_ready(out)
    ref = x * weight
    assert out.shape == ref.shape and out.dtype == ref.dtype
    assert jnp.allclose(out, ref), "mismatch vs reference (pallas path)"

    # Tiny-input fallback path (plain XLA elementwise, avoids launch overhead).
    x_small = jax.random.normal(kx2, (4, 2, 2), dtype=jnp.float32)
    out_small = toy_model_forward(x_small, weight)
    jax.block_until_ready(out_small)
    assert jnp.allclose(out_small, x_small * weight), "mismatch (fallback path)"

    print("KERNEL_OK")
</pallas_src>

<mosaic_0001>
module attributes {stable_mosaic.version = 11 : i64} {
  func.func @_mul_kernel(%arg0: i32, %arg1: memref<32x128xf32, #tpu.memory_space<vmem>>, %arg2: memref<1x128xf32, #tpu.memory_space<vmem>>, %arg3: memref<32x128xf32, #tpu.memory_space<vmem>>) attributes {dimension_semantics = [#tpu.dimension_semantics<parallel>], iteration_bounds = array<i64: 1>, scalar_prefetch = 0 : i64, scratch_operands = 0 : i64, tpu.core_type = #tpu.core_type<tc>, window_params = [{transform_indices = @transform_0, window_bounds = array<i64: 32, 128>}, {pipeline_mode = #tpu.pipeline_mode<synchronous>, transform_indices = @transform_1, window_bounds = array<i64: 1, 128>}, {transform_indices = @transform_2, window_bounds = array<i64: 32, 128>}]} {
    %c0 = arith.constant 0 : index
    %c0_0 = arith.constant 0 : index
    %0 = vector.load %arg1[%c0, %c0_0] : memref<32x128xf32, #tpu.memory_space<vmem>>, vector<32x128xf32>
    %c0_1 = arith.constant 0 : index
    %c0_2 = arith.constant 0 : index
    %1 = vector.load %arg2[%c0_1, %c0_2] : memref<1x128xf32, #tpu.memory_space<vmem>>, vector<1x128xf32>
    %2 = vector.broadcast %1 : vector<1x128xf32> to vector<32x128xf32>
    %3 = arith.mulf %0, %2 : vector<32x128xf32>
    %c0_3 = arith.constant 0 : index
    %c0_4 = arith.constant 0 : index
    %4 = vector.load %arg3[%c0_3, %c0_4] : memref<32x128xf32, #tpu.memory_space<vmem>>, vector<32x128xf32>
    tpu.vector_store %arg3[%c0_3, %c0_4], %3 {strides = array<i32>} : memref<32x128xf32, #tpu.memory_space<vmem>>, vector<32x128xf32>,
    return
  }
  func.func @transform_0(%arg0: i32) -> (i32, i32) {
    %c0_i32 = arith.constant 0 : i32
    %c0_i32_0 = arith.constant 0 : i32
    return %arg0, %c0_i32 : i32, i32
  }
  func.func @transform_1(%arg0: i32) -> (i32, i32) {
    %c0_i32 = arith.constant 0 : i32
    %c0_i32_0 = arith.constant 0 : i32
    %c0_i32_1 = arith.constant 0 : i32
    return %c0_i32, %c0_i32_0 : i32, i32
  }
  func.func @transform_2(%arg0: i32) -> (i32, i32) {
    %c0_i32 = arith.constant 0 : i32
    %c0_i32_0 = arith.constant 0 : i32
    return %arg0, %c0_i32 : i32, i32
  }
}

</mosaic_0001>

<llo_original>
// kernel: tpu_custom_call.1
$region0: #{tpu_custom_call.1}
  #allocation0 [shape = 'u32[]', space=smem, size = 0x4, offset = 0x4, fixed_abs, tag = 'smem constant byte address 0x4 - core index']
  #allocation1 [shape = 'u32[72,128]{1,0:T(1,128)}', space=vmem, size = 0x9000, scoped, tag = 'internal scratch']
  %s0 = inlined_call_operand.hbm [shape: f32[32,128], index: 0, kind: input, shape index: {}]
  %s1 = inlined_call_operand.hbm [shape: f32[1,128], index: 1, kind: input, shape index: {}]
  %s2 = inlined_call_operand.hbm [shape: f32[32,128], index: 2, kind: output, shape index: {}]
  %s3 = sld [smem:[#allocation0]]
  $region26: #{tpu_custom_call.1} parent=0
    _
  %s5 = ssub.s32 1, %s3
  %s6 = scalar_select 0, %s5, %s3
  $region1: #{tpu_custom_call.1} parent=0
    #allocation2 [shape = 'u8[16384]{0}', space=vmem, size = 0x4000, scoped, tag = 'input window, operand 0, single buffered']
    #allocation3 [shape = 's32[1]{0}', space=sflag, size = 0x4, scoped, tag = 'scoped memory for tpu_custom_call.1']
    #allocation4 [shape = 's32[1]{0}', space=sflag, size = 0x4, scoped, tag = 'scoped memory for tpu_custom_call.1']
    #allocation5 [shape = 'u8[512]{0}', space=vmem, size = 0x400, scoped, tag = 'input window, operand 1, single buffered']
    #allocation6 [shape = 's32[1]{0}', space=sflag, size = 0x4, scoped, tag = 'scoped memory for tpu_custom_call.1']
    #allocation7 [shape = 'u8[16384]{0}', space=vmem, size = 0x4000, scoped, tag = 'output window, operand 0, single buffered']
    %7 = vsyncpa [#allocation3], 0
    %8 = vsyncpa [#allocation6], 0
    %9 = vsyncpa [#allocation4], 0
    // Predicated region
    $region2: #{tpu_custom_call.1} parent=1 // pred_check
      _
    $region3: #{tpu_custom_call.1} parent=1 // pred_check_branch
      %11 = sbr.rel (0) target = $region5
    $region4: #{tpu_custom_call.1} parent=1 // pred_region
      %13 = vsyncadd [#allocation3], 0
      %s14 = sshll.u32 %s0, 4
      %s15 = int_to_ptr.hbm [resolvable:$true] %s14
      %s16 = sshll.u32 [#allocation2], 4
      %s17 = int_to_ptr.vmem [resolvable:$true] %s16
      %22 = dma.hbm_to_vmem [thread:$0]  %s15, 512, %s17, [#allocation3], 128, 128, 8
    $region5: #{tpu_custom_call.1} parent=1 // pred_fallthru
      _
    // Predicated region
    $region6: #{tpu_custom_call.1} parent=1 // pred_check
      _
    $region7: #{tpu_custom_call.1} parent=1 // pred_check_branch
      %24 = sbr.rel (0) target = $region9
    $region8: #{tpu_custom_call.1} parent=1 // pred_region
      %26 = vsyncadd [#allocation6], 0
      %s28 = sshll.u32 %s1, 4
      %s29 = int_to_ptr.hbm [resolvable:$true] %s28
      %s30 = sshll.u32 [#allocation5], 4
      %s31 = int_to_ptr.vmem [resolvable:$true] %s30
      %33 = dma.hbm_to_vmem [thread:$0]  %s29, 16, %s31, [#allocation6]
    $region9: #{tpu_custom_call.1} parent=1 // pred_fallthru
      _
    // Predicated region
    $region10: #{tpu_custom_call.1} parent=1 // pred_check
      _
    $region11: #{tpu_custom_call.1} parent=1 // pred_check_branch
      %35 = sbr.rel (0) target = $region13
    $region12: #{tpu_custom_call.1} parent=1 // pred_region
      %37 = dma.done [#allocation3], 512
    $region13: #{tpu_custom_call.1} parent=1 // pred_fallthru
      _
    // Predicated region
    $region14: #{tpu_custom_call.1} parent=1 // pred_check
      _
    $region15: #{tpu_custom_call.1} parent=1 // pred_check_branch
      %39 = sbr.rel (0) target = $region17
    $region16: #{tpu_custom_call.1} parent=1 // pred_region
      %41 = dma.done [#allocation6], 16
    $region17: #{tpu_custom_call.1} parent=1 // pred_fallthru
      _
    %v42 = vld [vmem:[#allocation2] sm:$0xff]
    %v43 = vld [vmem:[#allocation2 + $0x8] sm:$0xff]
    %v44 = vld [vmem:[#allocation2 + $0x10] sm:$0xff]
    %v45 = vld [vmem:[#allocation2 + $0x18] sm:$0xff]
    %v46 = vld [vmem:[#allocation5] sm:$0x1]
    %v48 = vperm.slane %v46, 0
    %v50 = vmul.f32 %v42, %v48
    %v51 = vmul.f32 %v43, %v48
    %v52 = vmul.f32 %v44, %v48
    %v53 = vmul.f32 %v45, %v48
    %54 = vst [vmem:[#allocation7] sm:$0xff] %v50
    %55 = vst [vmem:[#allocation7 + $0x8] sm:$0xff] %v51
    %56 = vst [vmem:[#allocation7 + $0x10] sm:$0xff] %v52
    %57 = vst [vmem:[#allocation7 + $0x18] sm:$0xff] %v53
    // Predicated region
    $region18: #{tpu_custom_call.1} parent=1 // pred_check
      _
    $region19: #{tpu_custom_call.1} parent=1 // pred_check_branch
      %59 = sbr.rel (0) target = $region21
    $region20: #{tpu_custom_call.1} parent=1 // pred_region
      %61 = vsyncadd [#allocation4], 0
      %s62 = sshll.u32 [#allocation7], 4
      %s63 = int_to_ptr.vmem [resolvable:$true] %s62
      %s64 = sshll.u32 %s2, 4
      %s65 = int_to_ptr.hbm [resolvable:$true] %s64
      %70 = dma.vmem_to_hbm [thread:$0]  %s63, 512, %s65, [#allocation4], 128, 128, 8
    $region21: #{tpu_custom_call.1} parent=1 // pred_fallthru
      _
    // Predicated region
    $region22: #{tpu_custom_call.1} parent=1 // pred_check
      _
    $region23: #{tpu_custom_call.1} parent=1 // pred_check_branch
      %72 = sbr.rel (0) target = $region25
    $region24: #{tpu_custom_call.1} parent=1 // pred_region
      %74 = dma.done [#allocation4], 512
    $region25: #{tpu_custom_call.1} parent=1 // pred_fallthru
      _
    %75 = vsyncpa [#allocation3], 1
    %76 = vsyncpa [#allocation6], 1
    %77 = vsyncpa [#allocation4], 1

</llo_original>
